<compile_context>
chip_gen: v5e
topology: v5e:2x2
jax: 0.10.0
libtpu: 0.0.40
codegen_flags: <defaults>
</compile_context>

<pallas_src>
import functools

import jax
import jax.numpy as jnp
from jax.experimental import pallas as pl
from jax.experimental.pallas import tpu as pltpu

CLAMP_MIN = -0.47
CLAMP_MAX = -0.25
BN_EPS = 1e-5


def _round_up(x, mult):
    return ((x + mult - 1) // mult) * mult


def _model_kernel(p_ref, w_ref, params_ref, bl_ref, o_ref, *, n, hw, m):
    # p_ref:      (m_pad, K_pad) bf16  im2col patch matrix (zero-padded)
    # w_ref:      (K_pad, Co)    bf16  flattened conv weight (zero-padded in K)
    # params_ref: (8, Co)        f32   row0=gamma, row1=beta, row2=lin_w
    # bl_ref:     (1, 1)         f32   linear bias (SMEM scalar)
    # o_ref:      (n, 1)         f32
    inv_m = 1.0 / float(m)
    inv_hw = 1.0 / float(hw)

    # ---- Conv2d as a single bf16 MXU matmul, f32 accumulation ----
    acc = jnp.dot(p_ref[...], w_ref[...],
                  preferred_element_type=jnp.float32)          # (m_pad, Co)

    # ---- BatchNorm2d (training batch stats) fused to per-channel scale/shift.
    # Zero-padded rows (no conv bias) produce acc == 0 and therefore contribute
    # nothing to s1/s2; dividing by the true m keeps the stats exact.
    s1 = jnp.sum(acc, axis=0, keepdims=True)                   # (1, Co)
    s2 = jnp.sum(acc * acc, axis=0, keepdims=True)             # (1, Co)
    mean = s1 * inv_m
    var = s2 * inv_m - mean * mean                             # biased variance

    gamma = params_ref[0:1, :]
    beta = params_ref[1:2, :]
    wl = params_ref[2:3, :]                                    # linear weight row

    scale = gamma * jax.lax.rsqrt(var + BN_EPS)
    shift = beta - mean * scale

    # ---- BN affine + ReLU in one FMA + max ----
    y = jnp.maximum(acc * scale + shift, 0.0)                  # (m_pad, Co)

    # ---- Reassociated AdaptiveAvgPool2d((1,1)) + Linear(Co -> 1) ----
    # Per-row dot with the linear weight first (lane reduce Co -> 1), then one
    # tiny matmul with a (n, m_pad) block pooling matrix (entries 1/hw for rows
    # belonging to that sample; padded rows match no sample and are excluded).
    v = jnp.sum(y * wl, axis=-1, keepdims=True)                # (m_pad, 1)

    m_pad = y.shape[0]
    col = jax.lax.broadcasted_iota(jnp.int32, (n, m_pad), 1)
    row = jax.lax.broadcasted_iota(jnp.int32, (n, m_pad), 0)
    lo = row * hw
    inside = (col >= lo) & (col < lo + hw)
    pool = jnp.where(inside, inv_hw, 0.0)                      # (n, m_pad) f32

    logits = jnp.dot(pool, v, preferred_element_type=jnp.float32) + bl_ref[0, 0]

    # ---- sigmoid -> clamp_min(-0.47) -> clamp_max(-0.25) ----
    z = jax.nn.sigmoid(logits)
    z = jnp.maximum(z, CLAMP_MIN)
    z = jnp.minimum(z, CLAMP_MAX)
    o_ref[...] = z.astype(o_ref.dtype)


def model_forward(x_nchw, conv_w_oihw, conv_b, bn_gamma, bn_beta, lin_w, lin_b):
    """x_nchw: (N, 3, H, W) float32. Returns (N, 1) float32."""
    del conv_b  # exactly cancelled by training-mode BatchNorm mean subtraction
    N, Ci, H, W = x_nchw.shape
    Co, _, KH, KW = conv_w_oihw.shape
    Ho, Wo = H - KH + 1, W - KW + 1
    hw = Ho * Wo
    m = N * hw
    K = Ci * KH * KW

    # Pad the contraction dim to a lane multiple and the row dim to a sublane
    # multiple; zero rows/cols contribute nothing to the matmul or BN stats.
    K_pad = _round_up(K, 128)
    m_pad = _round_up(m, 8)

    # im2col in the wrapper: NHWC output so the row-major flatten keeps each
    # sample's Ho*Wo rows contiguous; feature dim ordered (Ci, KH, KW), which
    # matches the OIHW weight flatten below.
    patches = jax.lax.conv_general_dilated_patches(
        x_nchw, (KH, KW), (1, 1), "VALID",
        dimension_numbers=("NCHW", "OIHW", "NHWC"))
    patches = patches.reshape(m, K)
    patches = jnp.pad(patches, ((0, m_pad - m), (0, K_pad - K)))
    patches = patches.astype(jnp.bfloat16)                     # (m_pad, K_pad)

    w_mat = conv_w_oihw.reshape(Co, K).T                       # (K, Co)
    w_mat = jnp.pad(w_mat, ((0, K_pad - K), (0, 0)))
    w_mat = w_mat.astype(jnp.bfloat16)                         # (K_pad, Co)

    # Single packed parameter slab: row0=gamma, row1=beta, row2=lin_w.
    params = jnp.zeros((8, Co), jnp.float32)
    params = params.at[0].set(bn_gamma.astype(jnp.float32))
    params = params.at[1].set(bn_beta.astype(jnp.float32))
    params = params.at[2].set(lin_w.reshape(Co).astype(jnp.float32))

    vmem = pl.BlockSpec(memory_space=pltpu.MemorySpace.VMEM)
    smem = pl.BlockSpec(memory_space=pltpu.MemorySpace.SMEM)

    out = pl.pallas_call(
        functools.partial(_model_kernel, n=N, hw=hw, m=m),
        out_shape=jax.ShapeDtypeStruct((N, 1), jnp.float32),
        in_specs=[vmem, vmem, vmem, smem],
        out_specs=vmem,
    )(
        patches,
        w_mat,
        params,
        lin_b.reshape(1, 1).astype(jnp.float32),
    )
    return out


if __name__ == "__main__":
    key = jax.random.PRNGKey(0)
    k_x, k_cw, k_cb, k_lw, k_lb = jax.random.split(key, 5)

    # Small shapes consistent with the module: N=2, Cin=3, 16x16 spatial.
    N, Ci, H, W = 2, 3, 16, 16
    Co, KH, KW = 16, 7, 7

    x = jax.random.normal(k_x, (N, Ci, H, W), jnp.float32)

    # Deterministic parameter init (shapes from the module's __init__).
    conv_w = jax.random.normal(k_cw, (Co, Ci, KH, KW), jnp.float32) * 0.05
    conv_b = jax.random.normal(k_cb, (Co,), jnp.float32) * 0.05
    bn_gamma = jnp.ones((Co,), jnp.float32)     # PyTorch BN default affine init
    bn_beta = jnp.zeros((Co,), jnp.float32)
    lin_w = jax.random.normal(k_lw, (1, Co), jnp.float32) * 0.1
    lin_b = jax.random.normal(k_lb, (1,), jnp.float32) * 0.1

    out = model_forward(x, conv_w, conv_b, bn_gamma, bn_beta, lin_w, lin_b)
    out = jax.block_until_ready(out)
    assert out.shape == (N, 1), out.shape
    # Sanity: sigmoid > 0, so clamp_max(-0.25) makes every output exactly -0.25.
    assert bool(jnp.all(jnp.isclose(out, CLAMP_MAX))), out
    print("KERNEL_OK")
</pallas_src>

<mosaic_0001>
module attributes {stable_mosaic.version = 11 : i64} {
  func.func @_model_kernel(%arg0: memref<200x256xbf16, #tpu.memory_space<vmem>>, %arg1: memref<256x16xbf16, #tpu.memory_space<vmem>>, %arg2: memref<8x16xf32, #tpu.memory_space<vmem>>, %arg3: memref<1x1xf32, #tpu.memory_space<smem>>, %arg4: memref<2x1xf32, #tpu.memory_space<vmem>>) attributes {dimension_semantics = [], scalar_prefetch = 0 : i64, scratch_operands = 0 : i64, tpu.core_type = #tpu.core_type<tc>} {
    %c0 = arith.constant 0 : index
    %c0_0 = arith.constant 0 : index
    %0 = vector.load %arg0[%c0, %c0_0] : memref<200x256xbf16, #tpu.memory_space<vmem>>, vector<200x256xbf16>
    %c0_1 = arith.constant 0 : index
    %c0_2 = arith.constant 0 : index
    %1 = vector.load %arg1[%c0_1, %c0_2] : memref<256x16xbf16, #tpu.memory_space<vmem>>, vector<256x16xbf16>
    %cst = arith.constant dense<0.000000e+00> : vector<200x16xf32>
    %2 = tpu.matmul %0, %1, %cst {dimension_numbers = #tpu.dot_dimension_numbers<[1], [0], [0], [1], [0, 0, 1, 1], [], []>} : vector<200x256xbf16>, vector<256x16xbf16>, vector<200x16xf32> -> vector<200x16xf32>
    %cst_3 = arith.constant dense<0.000000e+00> : vector<16xf32>
    %3 = vector.multi_reduction <add>, %2, %cst_3 [0] : vector<200x16xf32> to vector<16xf32>
    %4 = vector.shape_cast %3 : vector<16xf32> to vector<1x16xf32>
    %5 = arith.mulf %2, %2 : vector<200x16xf32>
    %cst_4 = arith.constant dense<0.000000e+00> : vector<16xf32>
    %6 = vector.multi_reduction <add>, %5, %cst_4 [0] : vector<200x16xf32> to vector<16xf32>
    %7 = vector.shape_cast %6 : vector<16xf32> to vector<1x16xf32>
    %cst_5 = arith.constant 5.000000e-03 : f32
    %8 = vector.broadcast %cst_5 : f32 to vector<1x16xf32>
    %9 = arith.mulf %4, %8 : vector<1x16xf32>
    %cst_6 = arith.constant 5.000000e-03 : f32
    %10 = vector.broadcast %cst_6 : f32 to vector<1x16xf32>
    %11 = arith.mulf %7, %10 : vector<1x16xf32>
    %12 = arith.mulf %9, %9 : vector<1x16xf32>
    %13 = arith.subf %11, %12 : vector<1x16xf32>
    %c0_7 = arith.constant 0 : index
    %c0_8 = arith.constant 0 : index
    %14 = vector.load %arg2[%c0_7, %c0_8] : memref<8x16xf32, #tpu.memory_space<vmem>>, vector<1x16xf32>
    %c1 = arith.constant 1 : index
    %c0_9 = arith.constant 0 : index
    %15 = vector.load %arg2[%c1, %c0_9] : memref<8x16xf32, #tpu.memory_space<vmem>>, vector<1x16xf32>
    %c2 = arith.constant 2 : index
    %c0_10 = arith.constant 0 : index
    %16 = vector.load %arg2[%c2, %c0_10] : memref<8x16xf32, #tpu.memory_space<vmem>>, vector<1x16xf32>
    %cst_11 = arith.constant 9.99999974E-6 : f32
    %17 = vector.broadcast %cst_11 : f32 to vector<1x16xf32>
    %18 = arith.addf %13, %17 : vector<1x16xf32>
    %19 = math.rsqrt %18 : vector<1x16xf32>
    %20 = arith.mulf %14, %19 : vector<1x16xf32>
    %21 = arith.mulf %9, %20 : vector<1x16xf32>
    %22 = arith.subf %15, %21 : vector<1x16xf32>
    %23 = vector.broadcast %20 : vector<1x16xf32> to vector<200x16xf32>
    %24 = arith.mulf %2, %23 : vector<200x16xf32>
    %25 = vector.broadcast %22 : vector<1x16xf32> to vector<200x16xf32>
    %26 = arith.addf %24, %25 : vector<200x16xf32>
    %cst_12 = arith.constant 0.000000e+00 : f32
    %27 = vector.broadcast %cst_12 : f32 to vector<200x16xf32>
    %28 = arith.maximumf %26, %27 : vector<200x16xf32>
    %29 = vector.broadcast %16 : vector<1x16xf32> to vector<200x16xf32>
    %30 = arith.mulf %28, %29 : vector<200x16xf32>
    %cst_13 = arith.constant dense<0.000000e+00> : vector<200xf32>
    %31 = vector.multi_reduction <add>, %30, %cst_13 [1] : vector<200x16xf32> to vector<200xf32>
    %32 = vector.shape_cast %31 : vector<200xf32> to vector<200x1xf32>
    %33 = tpu.iota {dimensions = array<i32: 1>} : vector<2x200xi32>
    %34 = tpu.iota {dimensions = array<i32: 0>} : vector<2x200xi32>
    %c100_i32 = arith.constant 100 : i32
    %35 = vector.broadcast %c100_i32 : i32 to vector<2x200xi32>
    %36 = arith.muli %34, %35 : vector<2x200xi32>
    %37 = arith.cmpi sge, %33, %36 : vector<2x200xi32>
    %c100_i32_14 = arith.constant 100 : i32
    %38 = vector.broadcast %c100_i32_14 : i32 to vector<2x200xi32>
    %39 = arith.addi %36, %38 : vector<2x200xi32>
    %40 = arith.cmpi slt, %33, %39 : vector<2x200xi32>
    %41 = arith.andi %37, %40 : vector<2x200xi1>
    %cst_15 = arith.constant 0.00999999977 : f32
    %cst_16 = arith.constant 0.000000e+00 : f32
    %42 = vector.broadcast %cst_15 : f32 to vector<2x200xf32>
    %43 = vector.broadcast %cst_16 : f32 to vector<2x200xf32>
    %44 = arith.select %41, %42, %43 : vector<2x200xi1>, vector<2x200xf32>
    %cst_17 = arith.constant dense<0.000000e+00> : vector<2x1xf32>
    %45 = tpu.matmul %44, %32, %cst_17 {dimension_numbers = #tpu.dot_dimension_numbers<[1], [0], [0], [1], [0, 0, 1, 1], [], []>} : vector<2x200xf32>, vector<200x1xf32>, vector<2x1xf32> -> vector<2x1xf32>
    %c0_18 = arith.constant 0 : index
    %c0_19 = arith.constant 0 : index
    %46 = memref.load %arg3[%c0_18, %c0_19] : memref<1x1xf32, #tpu.memory_space<smem>>
    %47 = vector.broadcast %46 : f32 to vector<2x1xf32>
    %48 = arith.addf %45, %47 : vector<2x1xf32>
    %49 = arith.negf %48 : vector<2x1xf32>
    %50 = math.exp %49 : vector<2x1xf32>
    %cst_20 = arith.constant 1.000000e+00 : f32
    %51 = vector.broadcast %cst_20 : f32 to vector<2x1xf32>
    %52 = arith.addf %51, %50 : vector<2x1xf32>
    %53 = arith.divf %51, %52 : vector<2x1xf32>
    %cst_21 = arith.constant -4.700000e-01 : f32
    %54 = vector.broadcast %cst_21 : f32 to vector<2x1xf32>
    %55 = arith.maximumf %53, %54 : vector<2x1xf32>
    %cst_22 = arith.constant -2.500000e-01 : f32
    %56 = vector.broadcast %cst_22 : f32 to vector<2x1xf32>
    %57 = arith.minimumf %55, %56 : vector<2x1xf32>
    %c0_23 = arith.constant 0 : index
    %c0_24 = arith.constant 0 : index
    %58 = vector.load %arg4[%c0_23, %c0_24] : memref<2x1xf32, #tpu.memory_space<vmem>>, vector<2x1xf32>
    tpu.vector_store %arg4[%c0_23, %c0_24], %57 {strides = array<i32>} : memref<2x1xf32, #tpu.memory_space<vmem>>, vector<2x1xf32>,
    return
  }
}

</mosaic_0001>

<llo_original>
// kernel: tpu_custom_call.1
$region0: #{tpu_custom_call.1}
  #allocation0 [shape = 'u32[]', space=smem, size = 0x4, offset = 0x4, fixed_abs, tag = 'smem constant byte address 0x4 - core index']
  #allocation1 [shape = 'u32[72,128]{1,0:T(1,128)}', space=vmem, size = 0x9000, scoped, tag = 'internal scratch']
  #allocation2 [shape = 'f32[1,1]{1,0:T(1,128)S(6)}', space=smem, size = 0x200, scoped, tag = 'scoped memory for tpu_custom_call.1']
  %s0 = inlined_call_operand.hbm [shape: bf16[200,256], index: 0, kind: input, shape index: {}]
  %s1 = inlined_call_operand.vmem [shape: bf16[256,16], index: 1, kind: input, shape index: {}]
  %s2 = inlined_call_operand.vmem [shape: f32[8,16], index: 2, kind: input, shape index: {}]
  %s3 = inlined_call_operand.<no memory space> [shape: f32[1,1], index: 3, kind: input, shape index: {}]
  %s4 = inlined_call_operand.vmem [shape: f32[2,1], index: 4, kind: output, shape index: {}]
  %s5 = sld [smem:[#allocation0]]
  $region30: #{tpu_custom_call.1} parent=0
    _
  %s7 = ssub.s32 1, %s5
  %s8 = scalar_select 0, %s7, %s5
  %9 = sst [smem:[#allocation2]] %s3
  $region1: #{tpu_custom_call.1} parent=0
    #allocation3 [shape = 'u8[102400]{0}', space=vmem, size = 0x19000, scoped, tag = 'input window, operand 0, single buffered']
    #allocation4 [shape = 's32[1]{0}', space=sflag, size = 0x4, scoped, tag = 'scoped memory for tpu_custom_call.1']
    %10 = vsyncpa [#allocation4], 0
    // Predicated region
    $region2: #{tpu_custom_call.1} parent=1 // pred_check
      _
    $region3: #{tpu_custom_call.1} parent=1 // pred_check_branch
      %12 = sbr.rel (0) target = $region5
    $region4: #{tpu_custom_call.1} parent=1 // pred_region
      %14 = vsyncadd [#allocation4], 0
      %s15 = sshll.u32 %s0, 4
      %s16 = int_to_ptr.hbm [resolvable:$true] %s15
      %s17 = sshll.u32 [#allocation3], 4
      %s18 = int_to_ptr.vmem [resolvable:$true] %s17
      %23 = dma.hbm_to_vmem [thread:$0]  %s16, 3200, %s18, [#allocation4], 128, 128, 8
    $region5: #{tpu_custom_call.1} parent=1 // pred_fallthru
      _
    // Predicated region
    $region6: #{tpu_custom_call.1} parent=1 // pred_check
      _
    $region7: #{tpu_custom_call.1} parent=1 // pred_check_branch
      %25 = sbr.rel (0) target = $region9
    $region8: #{tpu_custom_call.1} parent=1 // pred_region
      _
    $region9: #{tpu_custom_call.1} parent=1 // pred_fallthru
      _
    // Predicated region
    $region10: #{tpu_custom_call.1} parent=1 // pred_check
      _
    $region11: #{tpu_custom_call.1} parent=1 // pred_check_branch
      %27 = sbr.rel (0) target = $region13
    $region12: #{tpu_custom_call.1} parent=1 // pred_region
      _
    $region13: #{tpu_custom_call.1} parent=1 // pred_fallthru
      _
    // Predicated region
    $region14: #{tpu_custom_call.1} parent=1 // pred_check
      _
    $region15: #{tpu_custom_call.1} parent=1 // pred_check_branch
      %29 = sbr.rel (0) target = $region17
    $region16: #{tpu_custom_call.1} parent=1 // pred_region
      _
    $region17: #{tpu_custom_call.1} parent=1 // pred_fallthru
      _
    // Predicated region
    $region18: #{tpu_custom_call.1} parent=1 // pred_check
      _
    $region19: #{tpu_custom_call.1} parent=1 // pred_check_branch
      %31 = sbr.rel (0) target = $region21
    $region20: #{tpu_custom_call.1} parent=1 // pred_region
      %33 = dma.done [#allocation4], 3200
    $region21: #{tpu_custom_call.1} parent=1 // pred_fallthru
      _
    %v34 = vld [vmem:[#allocation3] sm:$0xff]
    %v35 = vld [vmem:[#allocation3 + $0x8] sm:$0xff]
    %v36 = vld [vmem:[#allocation3 + $0x10] sm:$0xff]
    %v37 = vld [vmem:[#allocation3 + $0x18] sm:$0xff]
    %v38 = vld [vmem:[#allocation3 + $0x20] sm:$0xff]
    %v39 = vld [vmem:[#allocation3 + $0x28] sm:$0xff]
    %v40 = vld [vmem:[#allocation3 + $0x30] sm:$0xff]
    %v41 = vld [vmem:[#allocation3 + $0x38] sm:$0xff]
    %v42 = vld [vmem:[#allocation3 + $0x40] sm:$0xff]
    %v43 = vld [vmem:[#allocation3 + $0x48] sm:$0xff]
    %v44 = vld [vmem:[#allocation3 + $0x50] sm:$0xff]
    %v45 = vld [vmem:[#allocation3 + $0x58] sm:$0xff]
    %v46 = vld [vmem:[#allocation3 + $0x60] sm:$0xff]
    %v47 = vld [vmem:[#allocation3 + $0x68] sm:$0xff]
    %v48 = vld [vmem:[#allocation3 + $0x70] sm:$0xff]
    %v49 = vld [vmem:[#allocation3 + $0x78] sm:$0xff]
    %v50 = vld [vmem:[#allocation3 + $0x80] sm:$0xff]
    %v51 = vld [vmem:[#allocation3 + $0x88] sm:$0xff]
    %v52 = vld [vmem:[#allocation3 + $0x90] sm:$0xff]
    %v53 = vld [vmem:[#allocation3 + $0x98] sm:$0xff]
    %v54 = vld [vmem:[#allocation3 + $0xa0] sm:$0xff]
    %v55 = vld [vmem:[#allocation3 + $0xa8] sm:$0xff]
    %v56 = vld [vmem:[#allocation3 + $0xb0] sm:$0xff]
    %v57 = vld [vmem:[#allocation3 + $0xb8] sm:$0xff]
    %v58 = vld [vmem:[#allocation3 + $0xc0] sm:$0xff]
    %v59 = vld [vmem:[%s1] sm:$0xf]
    %v60 = vld [vmem:[%s1 + $0x4] sm:$0xf]
    %v61 = vld [vmem:[%s1 + $0x8] sm:$0xf]
    %v62 = vld [vmem:[%s1 + $0xc] sm:$0xf]
    %v63 = vld [vmem:[%s1 + $0x10] sm:$0xf]
    %v64 = vld [vmem:[%s1 + $0x14] sm:$0xf]
    %v65 = vld [vmem:[%s1 + $0x18] sm:$0xf]
    %v66 = vld [vmem:[%s1 + $0x1c] sm:$0xf]
    %v67 = vld [vmem:[%s1 + $0x20] sm:$0xf]
    %v68 = vld [vmem:[%s1 + $0x24] sm:$0xf]
    %v69 = vld [vmem:[%s1 + $0x28] sm:$0xf]
    %v70 = vld [vmem:[%s1 + $0x2c] sm:$0xf]
    %v71 = vld [vmem:[%s1 + $0x30] sm:$0xf]
    %v72 = vld [vmem:[%s1 + $0x34] sm:$0xf]
    %v73 = vld [vmem:[%s1 + $0x38] sm:$0xf]
    %v74 = vld [vmem:[%s1 + $0x3c] sm:$0xf]
    %v75 = vld [vmem:[%s1 + $0x40] sm:$0xf]
    %v76 = vld [vmem:[%s1 + $0x44] sm:$0xf]
    %v77 = vld [vmem:[%s1 + $0x48] sm:$0xf]
    %v78 = vld [vmem:[%s1 + $0x4c] sm:$0xf]
    %v79 = vld [vmem:[%s1 + $0x50] sm:$0xf]
    %v80 = vld [vmem:[%s1 + $0x54] sm:$0xf]
    %v81 = vld [vmem:[%s1 + $0x58] sm:$0xf]
    %v82 = vld [vmem:[%s1 + $0x5c] sm:$0xf]
    %v83 = vld [vmem:[%s1 + $0x60] sm:$0xf]
    %v84 = vld [vmem:[%s1 + $0x64] sm:$0xf]
    %v85 = vld [vmem:[%s1 + $0x68] sm:$0xf]
    %v86 = vld [vmem:[%s1 + $0x6c] sm:$0xf]
    %v87 = vld [vmem:[%s1 + $0x70] sm:$0xf]
    %v88 = vld [vmem:[%s1 + $0x74] sm:$0xf]
    %v89 = vld [vmem:[%s1 + $0x78] sm:$0xf]
    %v90 = vld [vmem:[%s1 + $0x7c] sm:$0xf]
    %v116 = vunpack.c.l.b16 %v34
    %v117 = vunpack.c.h.b16 %v34
    %v118 = vunpack.c.l.b16 %v35
    %v119 = vunpack.c.h.b16 %v35
    %v120 = vunpack.c.l.b16 %v36
    %v121 = vunpack.c.h.b16 %v36
    %v122 = vunpack.c.l.b16 %v37
    %v123 = vunpack.c.h.b16 %v37
    %v124 = vunpack.c.l.b16 %v38
    %v125 = vunpack.c.h.b16 %v38
    %v126 = vunpack.c.l.b16 %v39
    %v127 = vunpack.c.h.b16 %v39
    %v128 = vunpack.c.l.b16 %v40
    %v129 = vunpack.c.h.b16 %v40
    %v130 = vunpack.c.l.b16 %v41
    %v131 = vunpack.c.h.b16 %v41
    %v132 = vunpack.c.l.b16 %v42
    %v133 = vunpack.c.h.b16 %v42
    %v134 = vunpack.c.l.b16 %v43
    %v135 = vunpack.c.h.b16 %v43
    %v136 = vunpack.c.l.b16 %v44
    %v137 = vunpack.c.h.b16 %v44
    %v138 = vunpack.c.l.b16 %v45
    %v139 = vunpack.c.h.b16 %v45
    %v140 = vunpack.c.l.b16 %v46
    %v141 = vunpack.c.h.b16 %v46
    %v142 = vunpack.c.l.b16 %v47
    %v143 = vunpack.c.h.b16 %v47
    %v144 = vunpack.c.l.b16 %v48
    %v145 = vunpack.c.h.b16 %v48
    %v146 = vunpack.c.l.b16 %v49
    %v147 = vunpack.c.h.b16 %v49
    %v148 = vunpack.c.l.b16 %v50
    %v149 = vunpack.c.h.b16 %v50
    %v150 = vunpack.c.l.b16 %v51
    %v151 = vunpack.c.h.b16 %v51
    %v152 = vunpack.c.l.b16 %v52
    %v153 = vunpack.c.h.b16 %v52
    %v154 = vunpack.c.l.b16 %v53
    %v155 = vunpack.c.h.b16 %v53
    %v156 = vunpack.c.l.b16 %v54
    %v157 = vunpack.c.h.b16 %v54
    %v158 = vunpack.c.l.b16 %v55
    %v159 = vunpack.c.h.b16 %v55
    %v160 = vunpack.c.l.b16 %v56
    %v161 = vunpack.c.h.b16 %v56
    %v162 = vunpack.c.l.b16 %v57
    %v163 = vunpack.c.h.b16 %v57
    %v164 = vunpack.c.l.b16 %v58
    %v165 = vunpack.c.h.b16 %v58
    %v166 = vpack.c.b16 %v118, %v116
    %v167 = vpack.c.b16 %v119, %v117
    %v168 = vpack.c.b16 %v122, %v120
    %v169 = vpack.c.b16 %v123, %v121
    %v170 = vpack.c.b16 %v126, %v124
    %v171 = vpack.c.b16 %v127, %v125
    %v172 = vpack.c.b16 %v130, %v128
    %v173 = vpack.c.b16 %v131, %v129
    %v174 = vpack.c.b16 %v134, %v132
    %v175 = vpack.c.b16 %v135, %v133
    %v176 = vpack.c.b16 %v138, %v136
    %v177 = vpack.c.b16 %v139, %v137
    %v178 = vpack.c.b16 %v142, %v140
    %v179 = vpack.c.b16 %v143, %v141
    %v180 = vpack.c.b16 %v146, %v144
    %v181 = vpack.c.b16 %v147, %v145
    %v182 = vpack.c.b16 %v150, %v148
    %v183 = vpack.c.b16 %v151, %v149
    %v184 = vpack.c.b16 %v154, %v152
    %v185 = vpack.c.b16 %v155, %v153
    %v186 = vpack.c.b16 %v158, %v156
    %v187 = vpack.c.b16 %v159, %v157
    %v188 = vpack.c.b16 %v162, %v160
    %v189 = vpack.c.b16 %v163, %v161
    %v190 = vpack.c.b16 %v164, %v164
    %v191 = vpack.c.b16 %v165, %v165
    %v250 = vunpack.c.l.b16 %v59
    %v251 = vunpack.c.l.b16 %v60
    %v252 = vunpack.c.l.b16 %v61
    %v253 = vunpack.c.l.b16 %v62
    %v254 = vunpack.c.l.b16 %v63
    %v255 = vunpack.c.l.b16 %v64
    %v256 = vunpack.c.l.b16 %v65
    %v257 = vunpack.c.l.b16 %v66
    %v258 = vunpack.c.l.b16 %v67
    %v259 = vunpack.c.l.b16 %v68
    %v260 = vunpack.c.l.b16 %v69
    %v261 = vunpack.c.l.b16 %v70
    %v262 = vunpack.c.l.b16 %v71
    %v263 = vunpack.c.l.b16 %v72
    %v264 = vunpack.c.l.b16 %v73
    %v265 = vunpack.c.l.b16 %v74
    %v266 = vunpack.c.l.b16 %v75
    %v267 = vunpack.c.l.b16 %v76
    %v268 = vunpack.c.l.b16 %v77
    %v269 = vunpack.c.l.b16 %v78
    %v270 = vunpack.c.l.b16 %v79
    %v271 = vunpack.c.l.b16 %v80
    %v272 = vunpack.c.l.b16 %v81
    %v273 = vunpack.c.l.b16 %v82
    %v274 = vunpack.c.l.b16 %v83
    %v275 = vunpack.c.l.b16 %v84
    %v276 = vunpack.c.l.b16 %v85
    %v277 = vunpack.c.l.b16 %v86
    %v278 = vunpack.c.l.b16 %v87
    %v279 = vunpack.c.l.b16 %v88
    %v280 = vunpack.c.l.b16 %v89
    %v281 = vunpack.c.l.b16 %v90
    %v282 = vpack.c.b16 %v251, %v250
    %v283 = vpack.c.b16 %v253, %v252
    %v284 = vpack.c.b16 %v255, %v254
    %v285 = vpack.c.b16 %v257, %v256
    %v286 = vpack.c.b16 %v259, %v258
    %v287 = vpack.c.b16 %v261, %v260
    %v288 = vpack.c.b16 %v263, %v262
    %v289 = vpack.c.b16 %v265, %v264
    %v290 = vpack.c.b16 %v267, %v266
    %v291 = vpack.c.b16 %v269, %v268
    %v292 = vpack.c.b16 %v271, %v270
    %v293 = vpack.c.b16 %v273, %v272
    %v294 = vpack.c.b16 %v275, %v274
    %v295 = vpack.c.b16 %v277, %v276
    %v296 = vpack.c.b16 %v279, %v278
    %v297 = vpack.c.b16 %v281, %v280
    %314 = vmatpush.bf16.msra.mxu0 %v289
    %315 = vmatpush.bf16.msra.mxu0 %v288
    %316 = vmatpush.bf16.msra.mxu0 %v287
    %317 = vmatpush.bf16.msra.mxu0 %v286
    %318 = vmatpush.bf16.msra.mxu0 %v285
    %319 = vmatpush.bf16.msra.mxu0 %v284
    %320 = vmatpush.bf16.msra.mxu0 %v283
    %321 = vmatpush.bf16.msra.mxu0 %v282
    %322 = vmatmul.bf16.gmra.mxu0 %v166
    %v323 = vpop.f32.mrf.mxu0
    %v324 = vadd.f32 0.0, %v323
    %v325 = vpop.f32.mrf.mxu0
    %v326 = vadd.f32 0.0, %v325
    %327 = vmatmul.bf16.gmra.mxu0 %v168
    %v328 = vpop.f32.mrf.mxu0
    %v329 = vadd.f32 0.0, %v328
    %v330 = vpop.f32.mrf.mxu0
    %v331 = vadd.f32 0.0, %v330
    %332 = vmatmul.bf16.gmra.mxu0 %v170
    %v333 = vpop.f32.mrf.mxu0
    %v334 = vadd.f32 0.0, %v333
    %v335 = vpop.f32.mrf.mxu0
    %v336 = vadd.f32 0.0, %v335
    %337 = vmatmul.bf16.gmra.mxu0 %v172
    %v338 = vpop.f32.mrf.mxu0
    %v339 = vadd.f32 0.0, %v338
    %v340 = vpop.f32.mrf.mxu0
    %v341 = vadd.f32 0.0, %v340
    %342 = vmatmul.bf16.gmra.mxu0 %v174
    %v343 = vpop.f32.mrf.mxu0
    %v344 = vadd.f32 0.0, %v343
    %v345 = vpop.f32.mrf.mxu0
    %v346 = vadd.f32 0.0, %v345
    %347 = vmatmul.bf16.gmra.mxu0 %v176
    %v348 = vpop.f32.mrf.mxu0
    %v349 = vadd.f32 0.0, %v348
    %v350 = vpop.f32.mrf.mxu0
    %v351 = vadd.f32 0.0, %v350
    %352 = vmatmul.bf16.gmra.mxu0 %v178
    %v353 = vpop.f32.mrf.mxu0
    %v354 = vadd.f32 0.0, %v353
    %v355 = vpop.f32.mrf.mxu0
    %v356 = vadd.f32 0.0, %v355
    %357 = vmatmul.bf16.gmra.mxu0 %v180
    %v358 = vpop.f32.mrf.mxu0
    %v359 = vadd.f32 0.0, %v358
    %v360 = vpop.f32.mrf.mxu0
    %v361 = vadd.f32 0.0, %v360
    %362 = vmatmul.bf16.gmra.mxu0 %v182
    %v363 = vpop.f32.mrf.mxu0
    %v364 = vadd.f32 0.0, %v363
    %v365 = vpop.f32.mrf.mxu0
    %v366 = vadd.f32 0.0, %v365
    %367 = vmatmul.bf16.gmra.mxu0 %v184
    %v368 = vpop.f32.mrf.mxu0
    %v369 = vadd.f32 0.0, %v368
    %v370 = vpop.f32.mrf.mxu0
    %v371 = vadd.f32 0.0, %v370
    %372 = vmatmul.bf16.gmra.mxu0 %v186
    %v373 = vpop.f32.mrf.mxu0
    %v374 = vadd.f32 0.0, %v373
    %v375 = vpop.f32.mrf.mxu0
    %v376 = vadd.f32 0.0, %v375
    %377 = vmatmul.bf16.gmra.mxu0 %v188
    %v378 = vpop.f32.mrf.mxu0
    %v379 = vadd.f32 0.0, %v378
    %v380 = vpop.f32.mrf.mxu0
    %v381 = vadd.f32 0.0, %v380
    %382 = vmatmul.bf16.gmra.mxu0 %v190
    %v383 = vpop.f32.mrf.mxu0
    %v384 = vadd.f32 0.0, %v383
    %v385 = vpop.f32.mrf.mxu0
    %386 = vdwg.mxu0
    %387 = vmatpush.bf16.msra.mxu0 %v297
    %388 = vmatpush.bf16.msra.mxu0 %v296
    %389 = vmatpush.bf16.msra.mxu0 %v295
    %390 = vmatpush.bf16.msra.mxu0 %v294
    %391 = vmatpush.bf16.msra.mxu0 %v293
    %392 = vmatpush.bf16.msra.mxu0 %v292
    %393 = vmatpush.bf16.msra.mxu0 %v291
    %394 = vmatpush.bf16.msra.mxu0 %v290
    %395 = vmatmul.bf16.gmra.mxu0 %v167
    %v396 = vpop.f32.mrf.mxu0
    %v397 = vadd.f32 %v324, %v396
    %v398 = vpop.f32.mrf.mxu0
    %v399 = vadd.f32 %v326, %v398
    %400 = vmatmul.bf16.gmra.mxu0 %v169
    %v401 = vpop.f32.mrf.mxu0
    %v402 = vadd.f32 %v329, %v401
    %v403 = vpop.f32.mrf.mxu0
    %v404 = vadd.f32 %v331, %v403
    %405 = vmatmul.bf16.gmra.mxu0 %v171
    %v406 = vpop.f32.mrf.mxu0
    %v407 = vadd.f32 %v334, %v406
    %v408 = vpop.f32.mrf.mxu0
    %v409 = vadd.f32 %v336, %v408
    %410 = vmatmul.bf16.gmra.mxu0 %v173
    %v411 = vpop.f32.mrf.mxu0
    %v412 = vadd.f32 %v339, %v411
    %v413 = vpop.f32.mrf.mxu0
    %v414 = vadd.f32 %v341, %v413
    %415 = vmatmul.bf16.gmra.mxu0 %v175
    %v416 = vpop.f32.mrf.mxu0
    %v417 = vadd.f32 %v344, %v416
    %v418 = vpop.f32.mrf.mxu0
    %v419 = vadd.f32 %v346, %v418
    %420 = vmatmul.bf16.gmra.mxu0 %v177
    %v421 = vpop.f32.mrf.mxu0
    %v422 = vadd.f32 %v349, %v421
    %v423 = vpop.f32.mrf.mxu0
    %v424 = vadd.f32 %v351, %v423
    %425 = vmatmul.bf16.gmra.mxu0 %v179
    %v426 = vpop.f32.mrf.mxu0
    %v427 = vadd.f32 %v354, %v426
    %v428 = vpop.f32.mrf.mxu0
    %v429 = vadd.f32 %v356, %v428
    %430 = vmatmul.bf16.gmra.mxu0 %v181
    %v431 = vpop.f32.mrf.mxu0
    %v432 = vadd.f32 %v359, %v431
    %v433 = vpop.f32.mrf.mxu0
    %v434 = vadd.f32 %v361, %v433
    %435 = vmatmul.bf16.gmra.mxu0 %v183
    %v436 = vpop.f32.mrf.mxu0
    %v437 = vadd.f32 %v364, %v436
    %v438 = vpop.f32.mrf.mxu0
    %v439 = vadd.f32 %v366, %v438
    %440 = vmatmul.bf16.gmra.mxu0 %v185
    %v441 = vpop.f32.mrf.mxu0
    %v442 = vadd.f32 %v369, %v441
    %v443 = vpop.f32.mrf.mxu0
    %v444 = vadd.f32 %v371, %v443
    %445 = vmatmul.bf16.gmra.mxu0 %v187
    %v446 = vpop.f32.mrf.mxu0
    %v447 = vadd.f32 %v374, %v446
    %v448 = vpop.f32.mrf.mxu0
    %v449 = vadd.f32 %v376, %v448
    %450 = vmatmul.bf16.gmra.mxu0 %v189
    %v451 = vpop.f32.mrf.mxu0
    %v452 = vadd.f32 %v379, %v451
    %v453 = vpop.f32.mrf.mxu0
    %v454 = vadd.f32 %v381, %v453
    %455 = vmatmul.bf16.gmra.mxu0 %v191
    %v456 = vpop.f32.mrf.mxu0
    %v457 = vadd.f32 %v384, %v456
    %v458 = vpop.f32.mrf.mxu0
    %459 = vdwg.mxu0
    %vm460 = vcmask 130048
    %v461 = vsel %vm460, %v397, 0.0
    %v462 = vsel %vm460, %v399, 0.0
    %v463 = vadd.f32 %v461, %v462
    %v464 = vsel %vm460, %v402, 0.0
    %v465 = vadd.f32 %v463, %v464
    %v466 = vsel %vm460, %v404, 0.0
    %v467 = vadd.f32 %v465, %v466
    %v468 = vsel %vm460, %v407, 0.0
    %v469 = vadd.f32 %v467, %v468
    %v470 = vsel %vm460, %v409, 0.0
    %v471 = vadd.f32 %v469, %v470
    %v472 = vsel %vm460, %v412, 0.0
    %v473 = vadd.f32 %v471, %v472
    %v474 = vsel %vm460, %v414, 0.0
    %v475 = vadd.f32 %v473, %v474
    %v476 = vsel %vm460, %v417, 0.0
    %v477 = vadd.f32 %v475, %v476
    %v478 = vsel %vm460, %v419, 0.0
    %v479 = vadd.f32 %v477, %v478
    %v480 = vsel %vm460, %v422, 0.0
    %v481 = vadd.f32 %v479, %v480
    %v482 = vsel %vm460, %v424, 0.0
    %v483 = vadd.f32 %v481, %v482
    %v484 = vsel %vm460, %v427, 0.0
    %v485 = vadd.f32 %v483, %v484
    %v486 = vsel %vm460, %v429, 0.0
    %v487 = vadd.f32 %v485, %v486
    %v488 = vsel %vm460, %v432, 0.0
    %v489 = vadd.f32 %v487, %v488
    %v490 = vsel %vm460, %v434, 0.0
    %v491 = vadd.f32 %v489, %v490
    %v492 = vsel %vm460, %v437, 0.0
    %v493 = vadd.f32 %v491, %v492
    %v494 = vsel %vm460, %v439, 0.0
    %v495 = vadd.f32 %v493, %v494
    %v496 = vsel %vm460, %v442, 0.0
    %v497 = vadd.f32 %v495, %v496
    %v498 = vsel %vm460, %v444, 0.0
    %v499 = vadd.f32 %v497, %v498
    %v500 = vsel %vm460, %v447, 0.0
    %v501 = vadd.f32 %v499, %v500
    %v502 = vsel %vm460, %v449, 0.0
    %v503 = vadd.f32 %v501, %v502
    %v504 = vsel %vm460, %v452, 0.0
    %v505 = vadd.f32 %v503, %v504
    %v506 = vsel %vm460, %v454, 0.0
    %v507 = vadd.f32 %v505, %v506
    %v508 = vsel %vm460, %v457, 0.0
    %v509 = vadd.f32 %v507, %v508
    %v510 = vrot.slane %v509, 4
    %v511 = vadd.f32 %v509, %v510
    %v512 = vrot.slane %v511, 2
    %v513 = vadd.f32 %v511, %v512
    %v514 = vrot.slane %v513, 1
    %v515 = vadd.f32 %v513, %v514
    %v516 = vmul.f32 %v397, %v397
    %v517 = vmul.f32 %v399, %v399
    %v518 = vmul.f32 %v402, %v402
    %v519 = vmul.f32 %v404, %v404
    %v520 = vmul.f32 %v407, %v407
    %v521 = vmul.f32 %v409, %v409
    %v522 = vmul.f32 %v412, %v412
    %v523 = vmul.f32 %v414, %v414
    %v524 = vmul.f32 %v417, %v417
    %v525 = vmul.f32 %v419, %v419
    %v526 = vmul.f32 %v422, %v422
    %v527 = vmul.f32 %v424, %v424
    %v528 = vmul.f32 %v427, %v427
    %v529 = vmul.f32 %v429, %v429
    %v530 = vmul.f32 %v432, %v432
    %v531 = vmul.f32 %v434, %v434
    %v532 = vmul.f32 %v437, %v437
    %v533 = vmul.f32 %v439, %v439
    %v534 = vmul.f32 %v442, %v442
    %v535 = vmul.f32 %v444, %v444
    %v536 = vmul.f32 %v447, %v447
    %v537 = vmul.f32 %v449, %v449
    %v538 = vmul.f32 %v452, %v452
    %v539 = vmul.f32 %v454, %v454
    %v540 = vmul.f32 %v457, %v457
    %v541 = vsel %vm460, %v516, 0.0
    %v542 = vsel %vm460, %v517, 0.0
    %v543 = vadd.f32 %v541, %v542
    %v544 = vsel %vm460, %v518, 0.0
    %v545 = vadd.f32 %v543, %v544
    %v546 = vsel %vm460, %v519, 0.0
    %v547 = vadd.f32 %v545, %v546
    %v548 = vsel %vm460, %v520, 0.0
    %v549 = vadd.f32 %v547, %v548
    %v550 = vsel %vm460, %v521, 0.0
    %v551 = vadd.f32 %v549, %v550
    %v552 = vsel %vm460, %v522, 0.0
    %v553 = vadd.f32 %v551, %v552
    %v554 = vsel %vm460, %v523, 0.0
    %v555 = vadd.f32 %v553, %v554
    %v556 = vsel %vm460, %v524, 0.0
    %v557 = vadd.f32 %v555, %v556
    %v558 = vsel %vm460, %v525, 0.0
    %v559 = vadd.f32 %v557, %v558
    %v560 = vsel %vm460, %v526, 0.0
    %v561 = vadd.f32 %v559, %v560
    %v562 = vsel %vm460, %v527, 0.0
    %v563 = vadd.f32 %v561, %v562
    %v564 = vsel %vm460, %v528, 0.0
    %v565 = vadd.f32 %v563, %v564
    %v566 = vsel %vm460, %v529, 0.0
    %v567 = vadd.f32 %v565, %v566
    %v568 = vsel %vm460, %v530, 0.0
    %v569 = vadd.f32 %v567, %v568
    %v570 = vsel %vm460, %v531, 0.0
    %v571 = vadd.f32 %v569, %v570
    %v572 = vsel %vm460, %v532, 0.0
    %v573 = vadd.f32 %v571, %v572
    %v574 = vsel %vm460, %v533, 0.0
    %v575 = vadd.f32 %v573, %v574
    %v576 = vsel %vm460, %v534, 0.0
    %v577 = vadd.f32 %v575, %v576
    %v578 = vsel %vm460, %v535, 0.0
    %v579 = vadd.f32 %v577, %v578
    %v580 = vsel %vm460, %v536, 0.0
    %v581 = vadd.f32 %v579, %v580
    %v582 = vsel %vm460, %v537, 0.0
    %v583 = vadd.f32 %v581, %v582
    %v584 = vsel %vm460, %v538, 0.0
    %v585 = vadd.f32 %v583, %v584
    %v586 = vsel %vm460, %v539, 0.0
    %v587 = vadd.f32 %v585, %v586
    %v588 = vsel %vm460, %v540, 0.0
    %v589 = vadd.f32 %v587, %v588
    %v590 = vrot.slane %v589, 4
    %v591 = vadd.f32 %v589, %v590
    %v592 = vrot.slane %v591, 2
    %v593 = vadd.f32 %v591, %v592
    %v594 = vrot.slane %v593, 1
    %v595 = vadd.f32 %v593, %v594
    %v596 = vmul.f32 %v515, 0.005
    %v597 = vmul.f32 %v595, 0.005
    %v598 = vmul.f32 %v596, %v596
    %v599 = vsub.f32 %v597, %v598
    %v600 = vld [vmem:[%s2] sm:$0x1]
    %v601 = vld [vmem:[%s2 + $0x1] sm:$0x1]
    %v602 = vld [vmem:[%s2 + $0x2] sm:$0x1]
    %v603 = vadd.f32 %v599, 1e-05
    %v604 = vrsqrt.pop %v603
    %v605 = vmul.f32 %v604, %v603
    %v606 = vmul.f32 %v605, %v604
    %v607 = vmul.f32 0.5, %v606
    %v608 = vsub.f32 1.5, %v607
    %v609 = vmul.f32 %v604, %v608
    %vm610 = vweird.f32 %v603
    %vm611 = vweird.f32 %v604
    %vm612 = vmor %vm610, %vm611
    %v613 = vsel %vm612, %v604, %v609
    %v614 = vmul.f32 %v600, %v613
    %v615 = vmul.f32 %v596, %v614
    %v616 = vsub.f32 %v601, %v615
    %v617 = vperm.slane %v614, 0
    %v618 = vmul.f32 %v397, %v617
    %v619 = vmul.f32 %v399, %v617
    %v620 = vmul.f32 %v402, %v617
    %v621 = vmul.f32 %v404, %v617
    %v622 = vmul.f32 %v407, %v617
    %v623 = vmul.f32 %v409, %v617
    %v624 = vmul.f32 %v412, %v617
    %v625 = vmul.f32 %v414, %v617
    %v626 = vmul.f32 %v417, %v617
    %v627 = vmul.f32 %v419, %v617
    %v628 = vmul.f32 %v422, %v617
    %v629 = vmul.f32 %v424, %v617
    %v630 = vmul.f32 %v427, %v617
    %v631 = vmul.f32 %v429, %v617
    %v632 = vmul.f32 %v432, %v617
    %v633 = vmul.f32 %v434, %v617
    %v634 = vmul.f32 %v437, %v617
    %v635 = vmul.f32 %v439, %v617
    %v636 = vmul.f32 %v442, %v617
    %v637 = vmul.f32 %v444, %v617
    %v638 = vmul.f32 %v447, %v617
    %v639 = vmul.f32 %v449, %v617
    %v640 = vmul.f32 %v452, %v617
    %v641 = vmul.f32 %v454, %v617
    %v642 = vmul.f32 %v457, %v617
    %v643 = vperm.slane %v616, 0
    %v644 = vadd.f32 %v618, %v643
    %v645 = vadd.f32 %v619, %v643
    %v646 = vadd.f32 %v620, %v643
    %v647 = vadd.f32 %v621, %v643
    %v648 = vadd.f32 %v622, %v643
    %v649 = vadd.f32 %v623, %v643
    %v650 = vadd.f32 %v624, %v643
    %v651 = vadd.f32 %v625, %v643
    %v652 = vadd.f32 %v626, %v643
    %v653 = vadd.f32 %v627, %v643
    %v654 = vadd.f32 %v628, %v643
    %v655 = vadd.f32 %v629, %v643
    %v656 = vadd.f32 %v630, %v643
    %v657 = vadd.f32 %v631, %v643
    %v658 = vadd.f32 %v632, %v643
    %v659 = vadd.f32 %v633, %v643
    %v660 = vadd.f32 %v634, %v643
    %v661 = vadd.f32 %v635, %v643
    %v662 = vadd.f32 %v636, %v643
    %v663 = vadd.f32 %v637, %v643
    %v664 = vadd.f32 %v638, %v643
    %v665 = vadd.f32 %v639, %v643
    %v666 = vadd.f32 %v640, %v643
    %v667 = vadd.f32 %v641, %v643
    %v668 = vadd.f32 %v642, %v643
    %v669 = vmax.f32 %v644, 0.0
    %v670 = vmax.f32 %v645, 0.0
    %v671 = vmax.f32 %v646, 0.0
    %v672 = vmax.f32 %v647, 0.0
    %v673 = vmax.f32 %v648, 0.0
    %v674 = vmax.f32 %v649, 0.0
    %v675 = vmax.f32 %v650, 0.0
    %v676 = vmax.f32 %v651, 0.0
    %v677 = vmax.f32 %v652, 0.0
    %v678 = vmax.f32 %v653, 0.0
    %v679 = vmax.f32 %v654, 0.0
    %v680 = vmax.f32 %v655, 0.0
    %v681 = vmax.f32 %v656, 0.0
    %v682 = vmax.f32 %v657, 0.0
    %v683 = vmax.f32 %v658, 0.0
    %v684 = vmax.f32 %v659, 0.0
    %v685 = vmax.f32 %v660, 0.0
    %v686 = vmax.f32 %v661, 0.0
    %v687 = vmax.f32 %v662, 0.0
    %v688 = vmax.f32 %v663, 0.0
    %v689 = vmax.f32 %v664, 0.0
    %v690 = vmax.f32 %v665, 0.0
    %v691 = vmax.f32 %v666, 0.0
    %v692 = vmax.f32 %v667, 0.0
    %v693 = vmax.f32 %v668, 0.0
    %v694 = vperm.slane %v602, 0
    %v695 = vmul.f32 %v669, %v694
    %v696 = vmul.f32 %v670, %v694
    %v697 = vmul.f32 %v671, %v694
    %v698 = vmul.f32 %v672, %v694
    %v699 = vmul.f32 %v673, %v694
    %v700 = vmul.f32 %v674, %v694
    %v701 = vmul.f32 %v675, %v694
    %v702 = vmul.f32 %v676, %v694
    %v703 = vmul.f32 %v677, %v694
    %v704 = vmul.f32 %v678, %v694
    %v705 = vmul.f32 %v679, %v694
    %v706 = vmul.f32 %v680, %v694
    %v707 = vmul.f32 %v681, %v694
    %v708 = vmul.f32 %v682, %v694
    %v709 = vmul.f32 %v683, %v694
    %v710 = vmul.f32 %v684, %v694
    %v711 = vmul.f32 %v685, %v694
    %v712 = vmul.f32 %v686, %v694
    %v713 = vmul.f32 %v687, %v694
    %v714 = vmul.f32 %v688, %v694
    %v715 = vmul.f32 %v689, %v694
    %v716 = vmul.f32 %v690, %v694
    %v717 = vmul.f32 %v691, %v694
    %v718 = vmul.f32 %v692, %v694
    %v719 = vmul.f32 %v693, %v694
    %v720 = vsel %vm460, %v695, 0.0
    %721 = vadd.xlane.f32.xlu0 %v720
    %v722 = vpop.xlane.xlu0 %721
    %v723 = vsel %vm460, %v696, 0.0
    %724 = vadd.xlane.f32.xlu0 %v723
    %v725 = vpop.xlane.xlu0 %724
    %v726 = vsel %vm460, %v697, 0.0
    %727 = vadd.xlane.f32.xlu0 %v726
    %v728 = vpop.xlane.xlu0 %727
    %v729 = vsel %vm460, %v698, 0.0
    %730 = vadd.xlane.f32.xlu0 %v729
    %v731 = vpop.xlane.xlu0 %730
    %v732 = vsel %vm460, %v699, 0.0
    %733 = vadd.xlane.f32.xlu0 %v732
    %v734 = vpop.xlane.xlu0 %733
    %v735 = vsel %vm460, %v700, 0.0
    %736 = vadd.xlane.f32.xlu0 %v735
    %v737 = vpop.xlane.xlu0 %736
    %v738 = vsel %vm460, %v701, 0.0
    %739 = vadd.xlane.f32.xlu0 %v738
    %v740 = vpop.xlane.xlu0 %739
    %v741 = vsel %vm460, %v702, 0.0
    %742 = vadd.xlane.f32.xlu0 %v741
    %v743 = vpop.xlane.xlu0 %742
    %v744 = vsel %vm460, %v703, 0.0
    %745 = vadd.xlane.f32.xlu0 %v744
    %v746 = vpop.xlane.xlu0 %745
    %v747 = vsel %vm460, %v704, 0.0
    %748 = vadd.xlane.f32.xlu0 %v747
    %v749 = vpop.xlane.xlu0 %748
    %v750 = vsel %vm460, %v705, 0.0
    %751 = vadd.xlane.f32.xlu0 %v750
    %v752 = vpop.xlane.xlu0 %751
    %v753 = vsel %vm460, %v706, 0.0
    %754 = vadd.xlane.f32.xlu0 %v753
    %v755 = vpop.xlane.xlu0 %754
    %v756 = vsel %vm460, %v707, 0.0
    %757 = vadd.xlane.f32.xlu0 %v756
    %v758 = vpop.xlane.xlu0 %757
    %v759 = vsel %vm460, %v708, 0.0
    %760 = vadd.xlane.f32.xlu0 %v759
    %v761 = vpop.xlane.xlu0 %760
    %v762 = vsel %vm460, %v709, 0.0
    %763 = vadd.xlane.f32.xlu0 %v762
    %v764 = vpop.xlane.xlu0 %763
    %v765 = vsel %vm460, %v710, 0.0
    %766 = vadd.xlane.f32.xlu0 %v765
    %v767 = vpop.xlane.xlu0 %766
    %v768 = vsel %vm460, %v711, 0.0
    %769 = vadd.xlane.f32.xlu0 %v768
    %v770 = vpop.xlane.xlu0 %769
    %v771 = vsel %vm460, %v712, 0.0
    %772 = vadd.xlane.f32.xlu0 %v771
    %v773 = vpop.xlane.xlu0 %772
    %v774 = vsel %vm460, %v713, 0.0
    %775 = vadd.xlane.f32.xlu0 %v774
    %v776 = vpop.xlane.xlu0 %775
    %v777 = vsel %vm460, %v714, 0.0
    %778 = vadd.xlane.f32.xlu0 %v777
    %v779 = vpop.xlane.xlu0 %778
    %v780 = vsel %vm460, %v715, 0.0
    %781 = vadd.xlane.f32.xlu0 %v780
    %v782 = vpop.xlane.xlu0 %781
    %v783 = vsel %vm460, %v716, 0.0
    %784 = vadd.xlane.f32.xlu0 %v783
    %v785 = vpop.xlane.xlu0 %784
    %v786 = vsel %vm460, %v717, 0.0
    %787 = vadd.xlane.f32.xlu0 %v786
    %v788 = vpop.xlane.xlu0 %787
    %v789 = vsel %vm460, %v718, 0.0
    %790 = vadd.xlane.f32.xlu0 %v789
    %v791 = vpop.xlane.xlu0 %790
    %v792 = vsel %vm460, %v719, 0.0
    %793 = vadd.xlane.f32.xlu0 %v792
    %v794 = vpop.xlane.xlu0 %793
    %v795 = vlaneseq
    %v796 = vand.u32 %v795, 127
    %v797 = vadd.s32 %v796, 128
    %v798 = vlaneseq
    %v799 = vshrl.u32 %v798, 7
    %v800 = vmul.u32 %v799, 100
    %vm801 = vcmp.ge.s32.totalorder %v796, %v800
    %vm802 = vcmp.ge.s32.totalorder %v797, %v800
    %v803 = vadd.s32 %v800, 100
    %vm804 = vcmp.lt.s32.totalorder %v796, %v803
    %vm805 = vcmp.lt.s32.totalorder %v797, %v803
    %vm806 = vmand %vm801, %vm804
    %vm807 = vmand %vm802, %vm805
    %v808 = vsel %vm806, 0.01, 0.0
    %v809 = vsel %vm807, 0.01, 0.0
    %s810 = sld [smem:[#allocation2]]
    %v811 = vstv %s810
    %vm812 = vcmask 588800
    %v814 = vsel %vm812, %v809, 0
    %816 = vmatpush.msra.mxu0 %v767
    %817 = vmatpush.msra.mxu0 %v764
    %818 = vmatpush.msra.mxu0 %v761
    %819 = vmatpush.msra.mxu0 %v758
    %820 = vmatpush.msra.mxu0 %v755
    %821 = vmatpush.msra.mxu0 %v752
    %822 = vmatpush.msra.mxu0 %v749
    %823 = vmatpush.msra.mxu0 %v746
    %824 = vmatpush.msra.mxu0 %v743
    %825 = vmatpush.msra.mxu0 %v740
    %826 = vmatpush.msra.mxu0 %v737
    %827 = vmatpush.msra.mxu0 %v734
    %828 = vmatpush.msra.mxu0 %v731
    %829 = vmatpush.msra.mxu0 %v728
    %830 = vmatpush.msra.mxu0 %v725
    %831 = vmatpush.msra.mxu0 %v722
    %832 = vmatmul.f32.gmra.mxu0 %v808
    %v833 = vpop.f32.mrf.mxu0
    %v834 = vadd.f32 %v811, %v833
    %835 = vdwg.mxu0
    %836 = vmatpush.msra.mxu0 0.0
    %837 = vmatpush.msra.mxu0 0.0
    %838 = vmatpush.msra.mxu0 0.0
    %839 = vmatpush.msra.mxu0 0.0
    %840 = vmatpush.msra.mxu0 0.0
    %841 = vmatpush.msra.mxu0 0.0
    %842 = vmatpush.msra.mxu0 0.0
    %843 = vmatpush.msra.mxu0 %v794
    %844 = vmatpush.msra.mxu0 %v791
    %845 = vmatpush.msra.mxu0 %v788
    %846 = vmatpush.msra.mxu0 %v785
    %847 = vmatpush.msra.mxu0 %v782
    %848 = vmatpush.msra.mxu0 %v779
    %849 = vmatpush.msra.mxu0 %v776
    %850 = vmatpush.msra.mxu0 %v773
    %851 = vmatpush.msra.mxu0 %v770
    %852 = vmatmul.f32.gmra.mxu0 %v814
    %v853 = vpop.f32.mrf.mxu0
    %v854 = vadd.f32 %v834, %v853
    %855 = vdwg.mxu0
    %v856 = vxor.u32 %v854, 2147483648
    %v857 = vmul.f32 %v856, 1.442695
    %v858 = vpow.pop %v857
    %v859 = vadd.f32 %v858, 1.0
    %v860 = vrcp.pop %v859
    %v861 = vmul.f32 %v859, %v860
    %v862 = vsub.f32 1.0, %v861
    %v863 = vmul.f32 %v860, %v862
    %v864 = vadd.f32 %v860, %v863
    %vm865 = vweird.f32 %v859
    %vm866 = vweird.f32 %v860
    %vm867 = vmor %vm865, %vm866
    %v868 = vsel %vm867, %v860, %v864
    %v869 = vand.u32 2147483647, %v859
    %vm870 = vcmp.eq.f32.partialorder %v869, 8.507059e+37
    %v871 = vand.u32 %v859, 2147483648
    %v872 = vor.u32 1.1754944e-38, %v871
    %v873 = vsel %vm870, %v872, %v868
    %v874 = vmul.f32 1.0, %v873
    %v875 = vmax.f32 %v874, -0.47
    %v876 = vmin.f32 %v875, -0.25
    %vm877 = vcmask 1024
    %878 = vst.msk [vmem:[%s4] sm:$0x3] %vm877, %v876
    // Predicated region
    $region22: #{tpu_custom_call.1} parent=1 // pred_check
      _
    $region23: #{tpu_custom_call.1} parent=1 // pred_check_branch
      %880 = sbr.rel (0) target = $region25
    $region24: #{tpu_custom_call.1} parent=1 // pred_region
      _
    $region25: #{tpu_custom_call.1} parent=1 // pred_fallthru
      _
    // Predicated region
    $region26: #{tpu_custom_call.1} parent=1 // pred_check
      _
    $region27: #{tpu_custom_call.1} parent=1 // pred_check_branch
      %882 = sbr.rel (0) target = $region29
    $region28: #{tpu_custom_call.1} parent=1 // pred_region
      _
    $region29: #{tpu_custom_call.1} parent=1 // pred_fallthru
      _
    %883 = vsyncpa [#allocation4], 1

</llo_original>
